<compile_context>
chip_gen: v5e
topology: v5e:2x2
jax: 0.10.0
libtpu: 0.0.40
codegen_flags: <defaults>
</compile_context>

<pallas_src>
import jax
import jax.numpy as jnp
from jax.experimental import pallas as pl
from jax.experimental.pallas import tpu as pltpu


def _round_up(x, m):
    return (x + m - 1) // m * m


def _choose_tile(total, max_tile, quantum):
    """Largest divisor of `total` that is <= max_tile and a multiple of `quantum`."""
    best = quantum
    t = quantum
    limit = min(total, max(max_tile, quantum))
    while t <= limit:
        if total % t == 0:
            best = t
        t += quantum
    return best


def conv_bn_relu_kernel(x_ref, w_ref, sb_ref, o_ref, acc_ref):
    # x_ref : (1, TM, TK)   im2col rows for this (image, M-tile, K-tile)
    # w_ref : (TK, TN)      conv weight tile (compute dtype)
    # sb_ref: (2, TN)       f32 [BN scale; BN bias]
    # o_ref : (1, TM, TN)
    # acc   : (TM, TN) f32  accumulator scratch (lives across the K grid axis)
    @pl.when(pl.program_id(3) == 0)
    def _init():
        acc_ref[...] = jnp.zeros_like(acc_ref)

    acc_ref[...] += jnp.dot(x_ref[0], w_ref[...],
                            preferred_element_type=jnp.float32)

    @pl.when(pl.program_id(3) == pl.num_programs(3) - 1)
    def _finalize():
        y = acc_ref[...] * sb_ref[0:1, :] + sb_ref[1:2, :]   # BN in f32
        o_ref[0] = jnp.maximum(y, 0.0).astype(o_ref.dtype)   # ReLU


def conv_bn_relu(x_nchw, w_oihw, gamma, beta, running_mean, running_var,
                 eps=1e-5, compute_dtype=None,
                 tile_m=512, tile_n=256, tile_k=2048):
    N, Cin, H, W = x_nchw.shape
    Cout, _, KH, KW = w_oihw.shape
    assert KH % 2 == 1 and KW % 2 == 1, "only odd kernels / 'same' padding, stride 1"
    ph, pw = (KH - 1) // 2, (KW - 1) // 2

    in_dtype = x_nchw.dtype
    out_dtype = in_dtype
    if compute_dtype is None:
        compute_dtype = in_dtype
    compute_dtype = jnp.dtype(compute_dtype)

    # ---- BatchNorm (eval mode): scale/bias applied in the f32 epilogue (exact). ----
    inv_std = jax.lax.rsqrt(running_var.astype(jnp.float32) + eps)
    scale = gamma.astype(jnp.float32) * inv_std                           # (Cout,)
    bias = beta.astype(jnp.float32) - running_mean.astype(jnp.float32) * scale

    # ---- Tile sizing (sublane-packing aware, divisor-based -> lane-dense blocks). ----
    M = H * W
    K = KH * KW * Cin
    Kp = _round_up(K, 128)
    Coutp = _round_up(Cout, 128)
    mult = max(8, 32 // compute_dtype.itemsize)          # f32:8, bf16:16, int8/fp8:32

    TK = _choose_tile(Kp, tile_k, 128)
    TN = _choose_tile(Coutp, tile_n, 128)
    if M % mult == 0:
        TM = _choose_tile(M, tile_m, mult)
    else:
        TM = min(_round_up(tile_m, mult), _round_up(M, mult))
    Mp = _round_up(M, TM)

    n_n = Coutp // TN
    n_k = Kp // TK
    n_m = Mp // TM
    # v7x megacore heuristic: batch=1 should still expose >=2 parallel grid steps.
    if N == 1 and n_m * n_n < 2 and TM > mult and M > mult:
        TM = max(mult, _round_up(TM // 2, mult))
        Mp = _round_up(M, TM)
        n_m = Mp // TM

    # ---- NCHW -> NHWC, spatial pad, im2col with the K padding folded into the concat
    #      (single write of the 9x slab; no second full-slab jnp.pad pass). ----
    x = jnp.transpose(x_nchw, (0, 2, 3, 1)).astype(compute_dtype)         # (N,H,W,Cin)
    x = jnp.pad(x, ((0, 0), (ph, ph), (pw, pw), (0, 0)))
    taps = [x[:, kh:kh + H, kw:kw + W, :] for kh in range(KH) for kw in range(KW)]
    if Kp > K:
        taps.append(jnp.zeros((N, H, W, Kp - K), compute_dtype))
    x_col = jnp.concatenate(taps, axis=-1).reshape(N, M, Kp)
    if Mp > M:
        # Ragged-tile fallback only (TM did not divide H*W).
        x_col = jnp.pad(x_col, ((0, 0), (0, Mp - M), (0, 0)))

    # ---- Weight OIHW -> (KH*KW*Cin, Cout) in compute dtype, padded to (Kp, Coutp). ----
    w = jnp.transpose(w_oihw, (2, 3, 1, 0)).reshape(K, Cout).astype(compute_dtype)
    w_p = jnp.pad(w, ((0, Kp - K), (0, Coutp - Cout)))

    # ---- BN scale/bias packed as one small f32 operand: row0=scale, row1=bias. ----
    sb = jnp.stack([jnp.pad(scale, (0, Coutp - Cout)),
                    jnp.pad(bias, (0, Coutp - Cout))], axis=0)            # (2, Coutp) f32

    # ---- BlockSpecs (single-buffer the grid-invariant operands). ----
    x_spec = pl.BlockSpec((1, TM, TK), lambda n, m, j, k: (n, m, k))
    if n_k == 1 and n_n == 1:
        w_spec = pl.BlockSpec((TK, TN), lambda n, m, j, k: (k, j),
                              pipeline_mode=pl.Buffered(1))
    else:
        w_spec = pl.BlockSpec((TK, TN), lambda n, m, j, k: (k, j))
    if n_n == 1:
        sb_spec = pl.BlockSpec((2, TN), lambda n, m, j, k: (0, j),
                               pipeline_mode=pl.Buffered(1))
    else:
        sb_spec = pl.BlockSpec((2, TN), lambda n, m, j, k: (0, j))
    o_spec = pl.BlockSpec((1, TM, TN), lambda n, m, j, k: (n, m, j))

    out_itemsize = jnp.dtype(out_dtype).itemsize
    cost = pl.CostEstimate(
        flops=2 * N * Mp * Kp * Coutp,
        transcendentals=0,
        bytes_accessed=(x_col.size * x_col.dtype.itemsize * n_n
                        + w_p.size * w_p.dtype.itemsize * (N * n_m)
                        + sb.size * sb.dtype.itemsize
                        + N * Mp * Coutp * out_itemsize),
    )

    out = pl.pallas_call(
        conv_bn_relu_kernel,
        out_shape=jax.ShapeDtypeStruct((N, Mp, Coutp), out_dtype),
        grid_spec=pltpu.PrefetchScalarGridSpec(
            num_scalar_prefetch=0,
            grid=(N, n_m, n_n, n_k),
            in_specs=[x_spec, w_spec, sb_spec],
            out_specs=o_spec,
            scratch_shapes=[pltpu.VMEM((TM, TN), jnp.float32)],
        ),
        compiler_params=pltpu.CompilerParams(
            dimension_semantics=("parallel", "parallel", "parallel", "arbitrary"),
            vmem_limit_bytes=64 * 1024 * 1024),
        cost_estimate=cost,
    )(x_col, w_p, sb)

    # Strip padding, back to NCHW (PyTorch convention).
    out = out[:, :M, :Cout].reshape(N, H, W, Cout)
    return jnp.transpose(out, (0, 3, 1, 2))


def _reference(x_nchw, w_oihw, gamma, beta, running_mean, running_var, eps=1e-5):
    # Pure-JAX reference (lax conv) for a correctness check.
    y = jax.lax.conv_general_dilated(
        x_nchw, w_oihw, window_strides=(1, 1), padding=((1, 1), (1, 1)),
        dimension_numbers=("NCHW", "OIHW", "NCHW"))
    inv_std = 1.0 / jnp.sqrt(running_var + eps)
    scale = (gamma * inv_std).reshape(1, -1, 1, 1)
    bias = (beta - running_mean * gamma * inv_std).reshape(1, -1, 1, 1)
    return jnp.maximum(y * scale + bias, 0.0)


if __name__ == "__main__":
    key = jax.random.PRNGKey(0)
    k_x, k_w, k_g, k_b, k_m, k_v = jax.random.split(key, 6)

    N, Cin, Cout, H, W, K = 2, 4, 8, 16, 16, 3

    x = jax.random.normal(k_x, (N, Cin, H, W), dtype=jnp.float32)
    # Conv2d weight (out_channels, in_channels, kH, kW), bias=False.
    w = jax.random.normal(k_w, (Cout, Cin, K, K), dtype=jnp.float32) * 0.1
    # BatchNorm2d parameters (deterministic, non-trivial).
    gamma = 1.0 + 0.1 * jax.random.normal(k_g, (Cout,), dtype=jnp.float32)
    beta = 0.1 * jax.random.normal(k_b, (Cout,), dtype=jnp.float32)
    running_mean = 0.1 * jax.random.normal(k_m, (Cout,), dtype=jnp.float32)
    running_var = jnp.abs(1.0 + 0.1 * jax.random.normal(k_v, (Cout,), dtype=jnp.float32))

    ref = _reference(x, w, gamma, beta, running_mean, running_var)

    # Exact path: compute dtype == input dtype (f32), tight tolerance.
    out = conv_bn_relu(x, w, gamma, beta, running_mean, running_var)
    out = jax.block_until_ready(out)
    assert out.shape == (N, Cout, H, W)
    assert jnp.allclose(out, ref, atol=1e-4, rtol=1e-4)

    # bf16 MXU path (perf review): bf16 operands, f32 accumulate + f32 BN/ReLU epilogue.
    out_bf = conv_bn_relu(x, w, gamma, beta, running_mean, running_var,
                          compute_dtype=jnp.bfloat16)
    out_bf = jax.block_until_ready(out_bf)
    assert out_bf.shape == (N, Cout, H, W)
    assert jnp.allclose(out_bf, ref, atol=5e-2, rtol=5e-2)

    print("KERNEL_OK")
</pallas_src>

<mosaic_0001>
module attributes {stable_mosaic.version = 11 : i64} {
  func.func @conv_bn_relu_kernel(%arg0: i32, %arg1: i32, %arg2: i32, %arg3: i32, %arg4: memref<1x256x128xf32, #tpu.memory_space<vmem>>, %arg5: memref<128x128xf32, #tpu.memory_space<vmem>>, %arg6: memref<2x128xf32, #tpu.memory_space<vmem>>, %arg7: memref<1x256x128xf32, #tpu.memory_space<vmem>>, %arg8: memref<256x128xf32, #tpu.memory_space<vmem>>) attributes {dimension_semantics = [#tpu.dimension_semantics<parallel>, #tpu.dimension_semantics<parallel>, #tpu.dimension_semantics<parallel>, #tpu.dimension_semantics<arbitrary>], iteration_bounds = array<i64: 2, 1, 1, 1>, scalar_prefetch = 0 : i64, scratch_operands = 1 : i64, tpu.core_type = #tpu.core_type<tc>, window_params = [{transform_indices = @transform_0, window_bounds = array<i64: 1, 256, 128>}, {pipeline_mode = #tpu.pipeline_mode<synchronous>, transform_indices = @transform_1, window_bounds = array<i64: 128, 128>}, {pipeline_mode = #tpu.pipeline_mode<synchronous>, transform_indices = @transform_2, window_bounds = array<i64: 2, 128>}, {transform_indices = @transform_3, window_bounds = array<i64: 1, 256, 128>}]} {
    %c0_i32 = arith.constant 0 : i32
    %0 = arith.cmpi eq, %arg3, %c0_i32 : i32
    %1 = arith.extui %0 : i1 to i32
    %c0_i32_0 = arith.constant 0 : i32
    %2 = arith.cmpi ne, %1, %c0_i32_0 : i32
    scf.if %2 {
      %cst_11 = arith.constant 0.000000e+00 : f32
      %13 = vector.broadcast %cst_11 : f32 to vector<256x128xf32>
      %c0_12 = arith.constant 0 : index
      %c0_13 = arith.constant 0 : index
      %14 = vector.load %arg8[%c0_12, %c0_13] : memref<256x128xf32, #tpu.memory_space<vmem>>, vector<256x128xf32>
      tpu.vector_store %arg8[%c0_12, %c0_13], %13 {strides = array<i32>} : memref<256x128xf32, #tpu.memory_space<vmem>>, vector<256x128xf32>,
    } else {
    }
    %c0 = arith.constant 0 : index
    %c0_1 = arith.constant 0 : index
    %3 = vector.load %arg8[%c0, %c0_1] : memref<256x128xf32, #tpu.memory_space<vmem>>, vector<256x128xf32>
    %c0_2 = arith.constant 0 : index
    %c0_3 = arith.constant 0 : index
    %c0_4 = arith.constant 0 : index
    %4 = vector.load %arg4[%c0_2, %c0_3, %c0_4] : memref<1x256x128xf32, #tpu.memory_space<vmem>>, vector<1x256x128xf32>
    %5 = vector.shape_cast %4 : vector<1x256x128xf32> to vector<256x128xf32>
    %c0_5 = arith.constant 0 : index
    %c0_6 = arith.constant 0 : index
    %6 = vector.load %arg5[%c0_5, %c0_6] : memref<128x128xf32, #tpu.memory_space<vmem>>, vector<128x128xf32>
    %cst = arith.constant dense<0.000000e+00> : vector<256x128xf32>
    %7 = tpu.matmul %5, %6, %cst {dimension_numbers = #tpu.dot_dimension_numbers<[1], [0], [0], [1], [0, 0, 1, 1], [], []>} : vector<256x128xf32>, vector<128x128xf32>, vector<256x128xf32> -> vector<256x128xf32>
    %8 = arith.addf %3, %7 : vector<256x128xf32>
    %c0_7 = arith.constant 0 : index
    %c0_8 = arith.constant 0 : index
    %9 = vector.load %arg8[%c0_7, %c0_8] : memref<256x128xf32, #tpu.memory_space<vmem>>, vector<256x128xf32>
    tpu.vector_store %arg8[%c0_7, %c0_8], %8 {strides = array<i32>} : memref<256x128xf32, #tpu.memory_space<vmem>>, vector<256x128xf32>,
    %c0_i32_9 = arith.constant 0 : i32
    %10 = arith.cmpi eq, %arg3, %c0_i32_9 : i32
    %11 = arith.extui %10 : i1 to i32
    %c0_i32_10 = arith.constant 0 : i32
    %12 = arith.cmpi ne, %11, %c0_i32_10 : i32
    scf.if %12 {
      %c0_11 = arith.constant 0 : index
      %c0_12 = arith.constant 0 : index
      %13 = vector.load %arg8[%c0_11, %c0_12] : memref<256x128xf32, #tpu.memory_space<vmem>>, vector<256x128xf32>
      %c0_13 = arith.constant 0 : index
      %c0_14 = arith.constant 0 : index
      %14 = vector.load %arg6[%c0_13, %c0_14] : memref<2x128xf32, #tpu.memory_space<vmem>>, vector<1x128xf32>
      %15 = vector.broadcast %14 : vector<1x128xf32> to vector<256x128xf32>
      %16 = arith.mulf %13, %15 : vector<256x128xf32>
      %c1 = arith.constant 1 : index
      %c0_15 = arith.constant 0 : index
      %17 = vector.load %arg6[%c1, %c0_15] : memref<2x128xf32, #tpu.memory_space<vmem>>, vector<1x128xf32>
      %18 = vector.broadcast %17 : vector<1x128xf32> to vector<256x128xf32>
      %19 = arith.addf %16, %18 : vector<256x128xf32>
      %cst_16 = arith.constant 0.000000e+00 : f32
      %20 = vector.broadcast %cst_16 : f32 to vector<256x128xf32>
      %21 = arith.maximumf %19, %20 : vector<256x128xf32>
      %c0_17 = arith.constant 0 : index
      %c0_18 = arith.constant 0 : index
      %c0_19 = arith.constant 0 : index
      %22 = vector.load %arg7[%c0_17, %c0_18, %c0_19] : memref<1x256x128xf32, #tpu.memory_space<vmem>>, vector<1x256x128xf32>
      %23 = vector.shape_cast %22 : vector<1x256x128xf32> to vector<256x128xf32>
      %24 = vector.shape_cast %21 : vector<256x128xf32> to vector<1x256x128xf32>
      tpu.vector_store %arg7[%c0_17, %c0_18, %c0_19], %24 {strides = array<i32>} : memref<1x256x128xf32, #tpu.memory_space<vmem>>, vector<1x256x128xf32>,
    } else {
    }
    return
  }
  func.func @transform_0(%arg0: i32, %arg1: i32, %arg2: i32, %arg3: i32) -> (i32, i32, i32) {
    %c0_i32 = arith.constant 0 : i32
    return %arg0, %arg1, %arg3 : i32, i32, i32
  }
  func.func @transform_1(%arg0: i32, %arg1: i32, %arg2: i32, %arg3: i32) -> (i32, i32) {
    %c0_i32 = arith.constant 0 : i32
    return %arg3, %arg2 : i32, i32
  }
  func.func @transform_2(%arg0: i32, %arg1: i32, %arg2: i32, %arg3: i32) -> (i32, i32) {
    %c0_i32 = arith.constant 0 : i32
    %c0_i32_0 = arith.constant 0 : i32
    return %c0_i32, %arg2 : i32, i32
  }
  func.func @transform_3(%arg0: i32, %arg1: i32, %arg2: i32, %arg3: i32) -> (i32, i32, i32) {
    %c0_i32 = arith.constant 0 : i32
    return %arg0, %arg1, %arg2 : i32, i32, i32
  }
}

</mosaic_0001>

<llo_original>
// kernel: tpu_custom_call.1
$region0: #{tpu_custom_call.1}
  #allocation0 [shape = 'u32[]', space=smem, size = 0x4, offset = 0x4, fixed_abs, tag = 'smem constant byte address 0x4 - core index']
  #allocation1 [shape = 'u32[72,128]{1,0:T(1,128)}', space=vmem, size = 0x9000, scoped, tag = 'internal scratch']
  #allocation2 [shape = 'f32[256,128]{1,0:T(8,128)}', space=vmem, size = 0x20000, scoped, tag = 'scratch operand']
  %s0 = inlined_call_operand.hbm [shape: f32[2,256,128], index: 0, kind: input, shape index: {}]
  %s1 = inlined_call_operand.hbm [shape: f32[128,128], index: 1, kind: input, shape index: {}]
  %s2 = inlined_call_operand.hbm [shape: f32[2,128], index: 2, kind: input, shape index: {}]
  %s3 = inlined_call_operand.hbm [shape: f32[2,256,128], index: 3, kind: output, shape index: {}]
  %s4 = sld [smem:[#allocation0]]
  $region65: #{tpu_custom_call.1} parent=0
    _
  %s6 = ssub.s32 1, %s4
  %s7 = scalar_select 0, %s6, %s4
  $region1: #{tpu_custom_call.1} parent=0
    #allocation3 [shape = 'u8[262144]{0}', space=vmem, size = 0x40000, scoped, tag = 'input window, operand 0']
    #allocation4 [shape = 's32[2]{0}', space=sflag, size = 0x8, scoped, tag = 'scoped memory for tpu_custom_call.1']
    #allocation5 [shape = 's32[2]{0}', space=sflag, size = 0x8, scoped, tag = 'scoped memory for tpu_custom_call.1']
    #allocation6 [shape = 'u8[65536]{0}', space=vmem, size = 0x10000, scoped, tag = 'input window, operand 1, single buffered']
    #allocation7 [shape = 's32[1]{0}', space=sflag, size = 0x4, scoped, tag = 'scoped memory for tpu_custom_call.1']
    #allocation8 [shape = 'u8[1024]{0}', space=vmem, size = 0x400, scoped, tag = 'input window, operand 2, single buffered']
    #allocation9 [shape = 'u8[262144]{0}', space=vmem, size = 0x40000, scoped, tag = 'output window, operand 0']
    %8 = vsyncpa [#allocation4], 0
    %s9 = scalar_lea.sflag [#allocation4], 1
    %10 = vsyncpa %s9, 0
    %11 = vsyncpa [#allocation7], 0
    %12 = vsyncpa [#allocation5], 0
    %s13 = scalar_lea.sflag [#allocation5], 1
    %14 = vsyncpa %s13, 0
    loop: start=0, step=1, limit=4
    $region2: #{tpu_custom_call.1} parent=1 // loop_pre_header
      _
    $region3: #{tpu_custom_call.1} parent=1 // loop_header
      %s16 = sphi 0, %s20
      %p17 = scmp.ge.s32.totalorder %s16, 4
      %s23 = sphi 0, %s49
      %s24 = sphi 0, %s45
      %s25 = sphi 0, %s41
      %s26 = sphi 0, %s37
      %s27 = sphi 0, %s23
      %s28 = sphi 0, %s24
      %s29 = sphi 0, %s25
      %s30 = sphi 0, %s26
      %s31 = sphi 0, %s27
      %s32 = sphi 0, %s28
      %s33 = sphi 0, %s29
      %s34 = sphi 0, %s30
      %s56 = sphi 0, %s58
      %s59 = sphi 0, %s56
      %s60 = sphi 0, %s59
      %s76 = sphi 0, %s60
      %s84 = sphi 0, %s86
      %s87 = sphi 0, %s84
      %s88 = sphi 0, %s87
      %s104 = sphi 0, %s88
      %s110 = sphi 0, %s112
      %s113 = sphi 0, %s110
      %s114 = sphi 0, %s113
      %s130 = sphi 0, %s114
      %s140 = sphi 0, %s142
      %s143 = sphi 0, %s140
      %s144 = sphi 0, %s143
      %s160 = sphi 0, %s144
    $region4: #{tpu_custom_call.1} parent=1 // loop_header_branch
      %19 = sbr.rel (%p17) target = $region8
    $region5: #{tpu_custom_call.1} parent=1 // loop_body
      %s21 = ssub.s32 %s16, 1
      %s22 = ssub.s32 %s16, 2
      %s35 = sadd.s32 1, %s26
      %p36 = scmp.ge.s32.totalorder %s35, 1
      %s37 = scalar_select %p36, 0, %s35
      %s38 = sadd.s32 1, %s25
      %s39 = scalar_select %p36, %s38, %s25
      %p40 = scmp.ge.s32.totalorder %s39, 1
      %s41 = scalar_select %p40, 0, %s39
      %s42 = sadd.s32 1, %s24
      %s43 = scalar_select %p40, %s42, %s24
      %p44 = scmp.ge.s32.totalorder %s43, 1
      %s45 = scalar_select %p44, 0, %s43
      %s46 = sadd.s32 1, %s23
      %s47 = scalar_select %p44, %s46, %s23
      %p48 = scmp.ge.s32.totalorder %s47, 2
      %s49 = scalar_select %p48, 0, %s47
      %s50 = ssub.s32 %s23, %s49
      %s51 = ssub.s32 %s24, %s45
      %s52 = sor.u32 %s50, %s51
      %s53 = ssub.s32 %s26, %s37
      %s54 = sor.u32 %s52, %s53
      %p55 = scmp.eq.s32.totalorder %s54, 0
      %s57 = sadd.s32 %s56, 1
      %s58 = scalar_select %p55, %s56, %s57
      %p61 = pneg %p55
      %p62 = scmp.eq.s32.totalorder %s16, 1
      %p63 = por %p61, %p62
      %p64 = scmp.ne.s32.totalorder %s56, %s59
      %p65 = scmp.eq.s32.totalorder %s16, 0
      %p66 = por %p64, %p65
      %p67 = scmp.ne.s32.totalorder %s56, %s59
      %p68 = scmp.eq.s32.totalorder %s21, 1
      %p69 = por %p67, %p68
      %p70 = scmp.ne.s32.totalorder %s59, %s60
      %p71 = scmp.eq.s32.totalorder %s21, 0
      %p72 = por %p70, %p71
      %p73 = scmp.ne.s32.totalorder %s59, %s60
      %p74 = scmp.eq.s32.totalorder %s22, 1
      %p75 = por %p73, %p74
      %p77 = scmp.ne.s32.totalorder %s60, %s76
      %p78 = scmp.eq.s32.totalorder %s22, 0
      %p79 = por %p77, %p78
      %s80 = ssub.s32 %s26, %s37
      %s81 = ssub.s32 %s25, %s41
      %s82 = sor.u32 %s80, %s81
      %p83 = scmp.eq.s32.totalorder %s82, 0
      %s85 = sadd.s32 %s84, 1
      %s86 = scalar_select %p83, %s84, %s85
      %p89 = pneg %p83
      %p90 = scmp.eq.s32.totalorder %s16, 1
      %p91 = por %p89, %p90
      %p92 = scmp.ne.s32.totalorder %s84, %s87
      %p93 = scmp.eq.s32.totalorder %s16, 0
      %p94 = por %p92, %p93
      %p95 = scmp.ne.s32.totalorder %s84, %s87
      %p96 = scmp.eq.s32.totalorder %s21, 1
      %p97 = por %p95, %p96
      %p98 = scmp.ne.s32.totalorder %s87, %s88
      %p99 = scmp.eq.s32.totalorder %s21, 0
      %p100 = por %p98, %p99
      %p101 = scmp.ne.s32.totalorder %s87, %s88
      %p102 = scmp.eq.s32.totalorder %s22, 1
      %p103 = por %p101, %p102
      %p105 = scmp.ne.s32.totalorder %s88, %s104
      %p106 = scmp.eq.s32.totalorder %s22, 0
      %p107 = por %p105, %p106
      %s108 = ssub.s32 %s25, %s41
      %p109 = scmp.eq.s32.totalorder %s108, 0
      %s111 = sadd.s32 %s110, 1
      %s112 = scalar_select %p109, %s110, %s111
      %p115 = pneg %p109
      %p116 = scmp.eq.s32.totalorder %s16, 1
      %p117 = por %p115, %p116
      %p118 = scmp.ne.s32.totalorder %s110, %s113
      %p119 = scmp.eq.s32.totalorder %s16, 0
      %p120 = por %p118, %p119
      %p121 = scmp.ne.s32.totalorder %s110, %s113
      %p122 = scmp.eq.s32.totalorder %s21, 1
      %p123 = por %p121, %p122
      %p124 = scmp.ne.s32.totalorder %s113, %s114
      %p125 = scmp.eq.s32.totalorder %s21, 0
      %p126 = por %p124, %p125
      %p127 = scmp.ne.s32.totalorder %s113, %s114
      %p128 = scmp.eq.s32.totalorder %s22, 1
      %p129 = por %p127, %p128
      %p131 = scmp.ne.s32.totalorder %s114, %s130
      %p132 = scmp.eq.s32.totalorder %s22, 0
      %p133 = por %p131, %p132
      %s134 = ssub.s32 %s23, %s49
      %s135 = ssub.s32 %s24, %s45
      %s136 = sor.u32 %s134, %s135
      %s137 = ssub.s32 %s25, %s41
      %s138 = sor.u32 %s136, %s137
      %p139 = scmp.eq.s32.totalorder %s138, 0
      %s141 = sadd.s32 %s140, 1
      %s142 = scalar_select %p139, %s140, %s141
      %p145 = pneg %p139
      %p146 = scmp.eq.s32.totalorder %s16, 1
      %p147 = por %p145, %p146
      %p148 = scmp.ne.s32.totalorder %s140, %s143
      %p149 = scmp.eq.s32.totalorder %s16, 0
      %p150 = por %p148, %p149
      %p151 = scmp.ne.s32.totalorder %s140, %s143
      %p152 = scmp.eq.s32.totalorder %s21, 1
      %p153 = por %p151, %p152
      %p154 = scmp.ne.s32.totalorder %s143, %s144
      %p155 = scmp.eq.s32.totalorder %s21, 0
      %p156 = por %p154, %p155
      %p157 = scmp.ne.s32.totalorder %s143, %s144
      %p158 = scmp.eq.s32.totalorder %s22, 1
      %p159 = por %p157, %p158
      %p161 = scmp.ne.s32.totalorder %s144, %s160
      %p162 = scmp.eq.s32.totalorder %s22, 0
      %p163 = por %p161, %p162
      %p164 = scmp.le.s32.totalorder 1, %s16
      %p165 = scmp.lt.s32.totalorder %s16, 3
      %p166 = pnand %p164, %p165
      %p167 = pneg %p166
      // Predicated region
      $region9: #{tpu_custom_call.1} parent=5 // pred_check
        _
      $region10: #{tpu_custom_call.1} parent=5 // pred_check_branch
        %169 = sbr.rel (%p166) target = $region12
      $region11: #{tpu_custom_call.1} parent=5 // pred_region
        %s170 = ssub.s32 %s16, 1
        // Predicated region
        $region13: #{tpu_custom_call.1} parent=11 // pred_check
          %p171 = pneg %p100
        $region14: #{tpu_custom_call.1} parent=11 // pred_check_branch
          %173 = sbr.rel (%p171) target = $region16
        $region15: #{tpu_custom_call.1} parent=11 // pred_region
          %s174 = smul.u32 16, %s30
          %176 = vsyncadd [#allocation7], 0
          %s177 = sadd.s32 %s29, %s174
          %s178 = smul.addr %s177, 8
          %s179 = scalar_lea.hbm %s1, %s178
          %s180 = sshll.u32 %s179, 4
          %s181 = int_to_ptr.hbm [resolvable:$true] %s180
          %s182 = sshll.u32 [#allocation6], 4
          %s183 = int_to_ptr.vmem [resolvable:$true] %s182
          %188 = dma.hbm_to_vmem [thread:$0]  %s181, 2048, %s183, [#allocation7], 128, 128, 8
        $region16: #{tpu_custom_call.1} parent=11 // pred_fallthru
          _
        // Predicated region
        $region17: #{tpu_custom_call.1} parent=11 // pred_check
          %p189 = pneg %p126
        $region18: #{tpu_custom_call.1} parent=11 // pred_check_branch
          %191 = sbr.rel (%p189) target = $region20
        $region19: #{tpu_custom_call.1} parent=11 // pred_region
          %193 = vsyncadd [#allocation7], 0
          %s194 = smul.addr %s29, 2
          %s195 = scalar_lea.hbm %s2, %s194
          %s197 = sshll.u32 %s195, 4
          %s198 = int_to_ptr.hbm [resolvable:$true] %s197
          %s199 = sshll.u32 [#allocation8], 4
          %s200 = int_to_ptr.vmem [resolvable:$true] %s199
          %202 = dma.hbm_to_vmem [thread:$0]  %s198, 32, %s200, [#allocation7]
        $region20: #{tpu_custom_call.1} parent=11 // pred_fallthru
          _
      $region12: #{tpu_custom_call.1} parent=5 // pred_fallthru
        _
      %p203 = scmp.lt.s32.totalorder %s16, 2
      // Predicated region
      $region21: #{tpu_custom_call.1} parent=5 // pred_check
        %p204 = pneg %p203
      $region22: #{tpu_custom_call.1} parent=5 // pred_check_branch
        %206 = sbr.rel (%p204) target = $region24
      $region23: #{tpu_custom_call.1} parent=5 // pred_region
        // Predicated region
        $region25: #{tpu_custom_call.1} parent=23 // pred_check
          %p207 = pneg %p66
        $region26: #{tpu_custom_call.1} parent=23 // pred_check_branch
          %209 = sbr.rel (%p207) target = $region28
        $region27: #{tpu_custom_call.1} parent=23 // pred_region
          %s210 = sand.u32 %s56, 1
          %s211 = scalar_lea.sflag [#allocation4], %s210
          %s212 = sand.u32 %s56, 1
          %s213 = smul.addr %s212, 256
          %s214 = scalar_lea.vmem [#allocation3], %s213
          %s215 = smul.u32 32, %s24
          %217 = vsyncadd %s211, 0
          %s218 = sadd.s32 %s26, %s215
          %s219 = smul.addr %s23, 32
          %s220 = sadd.s32 %s218, %s219
          %s221 = smul.addr %s220, 8
          %s222 = scalar_lea.hbm %s0, %s221
          %s223 = sshll.u32 %s222, 4
          %s224 = int_to_ptr.hbm [resolvable:$true] %s223
          %s225 = sshll.u32 %s214, 4
          %s226 = int_to_ptr.vmem [resolvable:$true] %s225
          %231 = dma.hbm_to_vmem [thread:$0]  %s224, 4096, %s226, %s211, 128, 128, 8
        $region28: #{tpu_custom_call.1} parent=23 // pred_fallthru
          _
      $region24: #{tpu_custom_call.1} parent=5 // pred_fallthru
        _
      %p232 = scmp.le.s32.totalorder 1, %s16
      %p233 = scmp.lt.s32.totalorder %s16, 3
      %p234 = pnand %p232, %p233
      %p235 = pneg %p234
      // Predicated region
      $region29: #{tpu_custom_call.1} parent=5 // pred_check
        _
      $region30: #{tpu_custom_call.1} parent=5 // pred_check_branch
        %237 = sbr.rel (%p234) target = $region32
      $region31: #{tpu_custom_call.1} parent=5 // pred_region
        %s238 = ssub.s32 %s16, 1
        %s239 = sand.u32 %s59, 1
        %s240 = scalar_lea.sflag [#allocation4], %s239
        %s241 = sand.u32 %s59, 1
        %s242 = smul.addr %s241, 256
        %s243 = scalar_lea.vmem [#allocation3], %s242
        // Predicated region
        $region33: #{tpu_custom_call.1} parent=31 // pred_check
          %p244 = pneg %p72
        $region34: #{tpu_custom_call.1} parent=31 // pred_check_branch
          %246 = sbr.rel (%p244) target = $region36
        $region35: #{tpu_custom_call.1} parent=31 // pred_region
          %248 = dma.done %s240, 4096
        $region36: #{tpu_custom_call.1} parent=31 // pred_fallthru
          _
        // Predicated region
        $region37: #{tpu_custom_call.1} parent=31 // pred_check
          %p249 = pneg %p100
        $region38: #{tpu_custom_call.1} parent=31 // pred_check_branch
          %251 = sbr.rel (%p249) target = $region40
        $region39: #{tpu_custom_call.1} parent=31 // pred_region
          %253 = dma.done [#allocation7], 2048
        $region40: #{tpu_custom_call.1} parent=31 // pred_fallthru
          _
        // Predicated region
        $region41: #{tpu_custom_call.1} parent=31 // pred_check
          %p254 = pneg %p126
        $region42: #{tpu_custom_call.1} parent=31 // pred_check_branch
          %256 = sbr.rel (%p254) target = $region44
        $region43: #{tpu_custom_call.1} parent=31 // pred_region
          %258 = dma.done [#allocation7], 32
        $region44: #{tpu_custom_call.1} parent=31 // pred_fallthru
          _
        %s259 = sand.u32 %s59, 1
        %s260 = scalar_lea.sflag [#allocation4], %s259
        %s261 = sand.u32 %s59, 1
        %s262 = smul.addr %s261, 256
        %s263 = scalar_lea.vmem [#allocation3], %s262
        %p264 = pneg %p72
        %p265 = pneg %p69
        %p266 = pneg %p100
        %p267 = pneg %p97
        %p268 = pneg %p126
        %p269 = pneg %p123
        %p270 = pneg %p156
        %p271 = pneg %p153
        %s272 = sand.u32 %s143, 1
        %s273 = scalar_lea.sflag [#allocation5], %s272
        %s274 = sand.u32 %s143, 1
        %s275 = smul.addr %s274, 256
        %s276 = scalar_lea.vmem [#allocation9], %s275
        %s277 = smul.u32 32, %s28
        %s278 = smul.u32 16, %s30
        %s279 = smul.u32 32, %s28
        %p280 = scmp.eq.s32.totalorder %s30, 0
        // Predicated region
        $region45: #{tpu_custom_call.1} parent=31 // pred_check
          %p281 = pneg %p280
        $region46: #{tpu_custom_call.1} parent=31 // pred_check_branch
          %283 = sbr.rel (%p281) target = $region48
        $region47: #{tpu_custom_call.1} parent=31 // pred_region
          %284 = vst [vmem:[#allocation2] sm:$0xff] 0.0
          %285 = vst [vmem:[#allocation2 + $0x8] sm:$0xff] 0.0
          %286 = vst [vmem:[#allocation2 + $0x10] sm:$0xff] 0.0
          %287 = vst [vmem:[#allocation2 + $0x18] sm:$0xff] 0.0
          %288 = vst [vmem:[#allocation2 + $0x20] sm:$0xff] 0.0
          %289 = vst [vmem:[#allocation2 + $0x28] sm:$0xff] 0.0
          %290 = vst [vmem:[#allocation2 + $0x30] sm:$0xff] 0.0
          %291 = vst [vmem:[#allocation2 + $0x38] sm:$0xff] 0.0
          %292 = vst [vmem:[#allocation2 + $0x40] sm:$0xff] 0.0
          %293 = vst [vmem:[#allocation2 + $0x48] sm:$0xff] 0.0
          %294 = vst [vmem:[#allocation2 + $0x50] sm:$0xff] 0.0
          %295 = vst [vmem:[#allocation2 + $0x58] sm:$0xff] 0.0
          %296 = vst [vmem:[#allocation2 + $0x60] sm:$0xff] 0.0
          %297 = vst [vmem:[#allocation2 + $0x68] sm:$0xff] 0.0
          %298 = vst [vmem:[#allocation2 + $0x70] sm:$0xff] 0.0
          %299 = vst [vmem:[#allocation2 + $0x78] sm:$0xff] 0.0
          %300 = vst [vmem:[#allocation2 + $0x80] sm:$0xff] 0.0
          %301 = vst [vmem:[#allocation2 + $0x88] sm:$0xff] 0.0
          %302 = vst [vmem:[#allocation2 + $0x90] sm:$0xff] 0.0
          %303 = vst [vmem:[#allocation2 + $0x98] sm:$0xff] 0.0
          %304 = vst [vmem:[#allocation2 + $0xa0] sm:$0xff] 0.0
          %305 = vst [vmem:[#allocation2 + $0xa8] sm:$0xff] 0.0
          %306 = vst [vmem:[#allocation2 + $0xb0] sm:$0xff] 0.0
          %307 = vst [vmem:[#allocation2 + $0xb8] sm:$0xff] 0.0
          %308 = vst [vmem:[#allocation2 + $0xc0] sm:$0xff] 0.0
          %309 = vst [vmem:[#allocation2 + $0xc8] sm:$0xff] 0.0
          %310 = vst [vmem:[#allocation2 + $0xd0] sm:$0xff] 0.0
          %311 = vst [vmem:[#allocation2 + $0xd8] sm:$0xff] 0.0
          %312 = vst [vmem:[#allocation2 + $0xe0] sm:$0xff] 0.0
          %313 = vst [vmem:[#allocation2 + $0xe8] sm:$0xff] 0.0
          %314 = vst [vmem:[#allocation2 + $0xf0] sm:$0xff] 0.0
          %315 = vst [vmem:[#allocation2 + $0xf8] sm:$0xff] 0.0
        $region48: #{tpu_custom_call.1} parent=31 // pred_fallthru
          _
        %v316 = vld [vmem:[#allocation2] sm:$0xff]
        %v317 = vld [vmem:[#allocation2 + $0x8] sm:$0xff]
        %v318 = vld [vmem:[#allocation2 + $0x10] sm:$0xff]
        %v319 = vld [vmem:[#allocation2 + $0x18] sm:$0xff]
        %v320 = vld [vmem:[#allocation2 + $0x20] sm:$0xff]
        %v321 = vld [vmem:[#allocation2 + $0x28] sm:$0xff]
        %v322 = vld [vmem:[#allocation2 + $0x30] sm:$0xff]
        %v323 = vld [vmem:[#allocation2 + $0x38] sm:$0xff]
        %v324 = vld [vmem:[#allocation2 + $0x40] sm:$0xff]
        %v325 = vld [vmem:[#allocation2 + $0x48] sm:$0xff]
        %v326 = vld [vmem:[#allocation2 + $0x50] sm:$0xff]
        %v327 = vld [vmem:[#allocation2 + $0x58] sm:$0xff]
        %v328 = vld [vmem:[#allocation2 + $0x60] sm:$0xff]
        %v329 = vld [vmem:[#allocation2 + $0x68] sm:$0xff]
        %v330 = vld [vmem:[#allocation2 + $0x70] sm:$0xff]
        %v331 = vld [vmem:[#allocation2 + $0x78] sm:$0xff]
        %v332 = vld [vmem:[#allocation2 + $0x80] sm:$0xff]
        %v333 = vld [vmem:[#allocation2 + $0x88] sm:$0xff]
        %v334 = vld [vmem:[#allocation2 + $0x90] sm:$0xff]
        %v335 = vld [vmem:[#allocation2 + $0x98] sm:$0xff]
        %v336 = vld [vmem:[#allocation2 + $0xa0] sm:$0xff]
        %v337 = vld [vmem:[#allocation2 + $0xa8] sm:$0xff]
        %v338 = vld [vmem:[#allocation2 + $0xb0] sm:$0xff]
        %v339 = vld [vmem:[#allocation2 + $0xb8] sm:$0xff]
        %v340 = vld [vmem:[#allocation2 + $0xc0] sm:$0xff]
        %v341 = vld [vmem:[#allocation2 + $0xc8] sm:$0xff]
        %v342 = vld [vmem:[#allocation2 + $0xd0] sm:$0xff]
        %v343 = vld [vmem:[#allocation2 + $0xd8] sm:$0xff]
        %v344 = vld [vmem:[#allocation2 + $0xe0] sm:$0xff]
        %v345 = vld [vmem:[#allocation2 + $0xe8] sm:$0xff]
        %v346 = vld [vmem:[#allocation2 + $0xf0] sm:$0xff]
        %v347 = vld [vmem:[#allocation2 + $0xf8] sm:$0xff]
        %v348 = vld [vmem:[%s243] sm:$0xff]
        %v349 = vld [vmem:[%s243 + $0x8] sm:$0xff]
        %v350 = vld [vmem:[%s243 + $0x10] sm:$0xff]
        %v351 = vld [vmem:[%s243 + $0x18] sm:$0xff]
        %v352 = vld [vmem:[%s243 + $0x20] sm:$0xff]
        %v353 = vld [vmem:[%s243 + $0x28] sm:$0xff]
        %v354 = vld [vmem:[%s243 + $0x30] sm:$0xff]
        %v355 = vld [vmem:[%s243 + $0x38] sm:$0xff]
        %v356 = vld [vmem:[%s243 + $0x40] sm:$0xff]
        %v357 = vld [vmem:[%s243 + $0x48] sm:$0xff]
        %v358 = vld [vmem:[%s243 + $0x50] sm:$0xff]
        %v359 = vld [vmem:[%s243 + $0x58] sm:$0xff]
        %v360 = vld [vmem:[%s243 + $0x60] sm:$0xff]
        %v361 = vld [vmem:[%s243 + $0x68] sm:$0xff]
        %v362 = vld [vmem:[%s243 + $0x70] sm:$0xff]
        %v363 = vld [vmem:[%s243 + $0x78] sm:$0xff]
        %v364 = vld [vmem:[%s243 + $0x80] sm:$0xff]
        %v365 = vld [vmem:[%s243 + $0x88] sm:$0xff]
        %v366 = vld [vmem:[%s243 + $0x90] sm:$0xff]
        %v367 = vld [vmem:[%s243 + $0x98] sm:$0xff]
        %v368 = vld [vmem:[%s243 + $0xa0] sm:$0xff]
        %v369 = vld [vmem:[%s243 + $0xa8] sm:$0xff]
        %v370 = vld [vmem:[%s243 + $0xb0] sm:$0xff]
        %v371 = vld [vmem:[%s243 + $0xb8] sm:$0xff]
        %v372 = vld [vmem:[%s243 + $0xc0] sm:$0xff]
        %v373 = vld [vmem:[%s243 + $0xc8] sm:$0xff]
        %v374 = vld [vmem:[%s243 + $0xd0] sm:$0xff]
        %v375 = vld [vmem:[%s243 + $0xd8] sm:$0xff]
        %v376 = vld [vmem:[%s243 + $0xe0] sm:$0xff]
        %v377 = vld [vmem:[%s243 + $0xe8] sm:$0xff]
        %v378 = vld [vmem:[%s243 + $0xf0] sm:$0xff]
        %v379 = vld [vmem:[%s243 + $0xf8] sm:$0xff]
        %v380 = vld [vmem:[#allocation6] sm:$0xff]
        %v381 = vld [vmem:[#allocation6 + $0x8] sm:$0xff]
        %v382 = vld [vmem:[#allocation6 + $0x10] sm:$0xff]
        %v383 = vld [vmem:[#allocation6 + $0x18] sm:$0xff]
        %v384 = vld [vmem:[#allocation6 + $0x20] sm:$0xff]
        %v385 = vld [vmem:[#allocation6 + $0x28] sm:$0xff]
        %v386 = vld [vmem:[#allocation6 + $0x30] sm:$0xff]
        %v387 = vld [vmem:[#allocation6 + $0x38] sm:$0xff]
        %v388 = vld [vmem:[#allocation6 + $0x40] sm:$0xff]
        %v389 = vld [vmem:[#allocation6 + $0x48] sm:$0xff]
        %v390 = vld [vmem:[#allocation6 + $0x50] sm:$0xff]
        %v391 = vld [vmem:[#allocation6 + $0x58] sm:$0xff]
        %v392 = vld [vmem:[#allocation6 + $0x60] sm:$0xff]
        %v393 = vld [vmem:[#allocation6 + $0x68] sm:$0xff]
        %v394 = vld [vmem:[#allocation6 + $0x70] sm:$0xff]
        %v395 = vld [vmem:[#allocation6 + $0x78] sm:$0xff]
        %396 = vmatpush.msra.mxu0 %v395
        %397 = vmatpush.msra.mxu0 %v394
        %398 = vmatpush.msra.mxu0 %v393
        %399 = vmatpush.msra.mxu0 %v392
        %400 = vmatpush.msra.mxu0 %v391
        %401 = vmatpush.msra.mxu0 %v390
        %402 = vmatpush.msra.mxu0 %v389
        %403 = vmatpush.msra.mxu0 %v388
        %404 = vmatpush.msra.mxu0 %v387
        %405 = vmatpush.msra.mxu0 %v386
        %406 = vmatpush.msra.mxu0 %v385
        %407 = vmatpush.msra.mxu0 %v384
        %408 = vmatpush.msra.mxu0 %v383
        %409 = vmatpush.msra.mxu0 %v382
        %410 = vmatpush.msra.mxu0 %v381
        %411 = vmatpush.msra.mxu0 %v380
        %412 = vmatmul.f32.gmra.mxu0 %v348
        %v413 = vpop.f32.mrf.mxu0
        %v414 = vadd.f32 0.0, %v413
        %415 = vmatmul.f32.gmra.mxu0 %v349
        %v416 = vpop.f32.mrf.mxu0
        %v417 = vadd.f32 0.0, %v416
        %418 = vmatmul.f32.gmra.mxu0 %v350
        %v419 = vpop.f32.mrf.mxu0
        %v420 = vadd.f32 0.0, %v419
        %421 = vmatmul.f32.gmra.mxu0 %v351
        %v422 = vpop.f32.mrf.mxu0
        %v423 = vadd.f32 0.0, %v422
        %424 = vmatmul.f32.gmra.mxu0 %v352
        %v425 = vpop.f32.mrf.mxu0
        %v426 = vadd.f32 0.0, %v425
        %427 = vmatmul.f32.gmra.mxu0 %v353
        %v428 = vpop.f32.mrf.mxu0
        %v429 = vadd.f32 0.0, %v428
        %430 = vmatmul.f32.gmra.mxu0 %v354
        %v431 = vpop.f32.mrf.mxu0
        %v432 = vadd.f32 0.0, %v431
        %433 = vmatmul.f32.gmra.mxu0 %v355
        %v434 = vpop.f32.mrf.mxu0
        %v435 = vadd.f32 0.0, %v434
        %436 = vmatmul.f32.gmra.mxu0 %v356
        %v437 = vpop.f32.mrf.mxu0
        %v438 = vadd.f32 0.0, %v437
        %439 = vmatmul.f32.gmra.mxu0 %v357
        %v440 = vpop.f32.mrf.mxu0
        %v441 = vadd.f32 0.0, %v440
        %442 = vmatmul.f32.gmra.mxu0 %v358
        %v443 = vpop.f32.mrf.mxu0
        %v444 = vadd.f32 0.0, %v443
        %445 = vmatmul.f32.gmra.mxu0 %v359
        %v446 = vpop.f32.mrf.mxu0
        %v447 = vadd.f32 0.0, %v446
        %448 = vmatmul.f32.gmra.mxu0 %v360
        %v449 = vpop.f32.mrf.mxu0
        %v450 = vadd.f32 0.0, %v449
        %451 = vmatmul.f32.gmra.mxu0 %v361
        %v452 = vpop.f32.mrf.mxu0
        %v453 = vadd.f32 0.0, %v452
        %454 = vmatmul.f32.gmra.mxu0 %v362
        %v455 = vpop.f32.mrf.mxu0
        %v456 = vadd.f32 0.0, %v455
        %457 = vmatmul.f32.gmra.mxu0 %v363
        %v458 = vpop.f32.mrf.mxu0
        %v459 = vadd.f32 0.0, %v458
        %460 = vmatmul.f32.gmra.mxu0 %v364
        %v461 = vpop.f32.mrf.mxu0
        %v462 = vadd.f32 0.0, %v461
        %463 = vmatmul.f32.gmra.mxu0 %v365
        %v464 = vpop.f32.mrf.mxu0
        %v465 = vadd.f32 0.0, %v464
        %466 = vmatmul.f32.gmra.mxu0 %v366
        %v467 = vpop.f32.mrf.mxu0
        %v468 = vadd.f32 0.0, %v467
        %469 = vmatmul.f32.gmra.mxu0 %v367
        %v470 = vpop.f32.mrf.mxu0
        %v471 = vadd.f32 0.0, %v470
        %472 = vmatmul.f32.gmra.mxu0 %v368
        %v473 = vpop.f32.mrf.mxu0
        %v474 = vadd.f32 0.0, %v473
        %475 = vmatmul.f32.gmra.mxu0 %v369
        %v476 = vpop.f32.mrf.mxu0
        %v477 = vadd.f32 0.0, %v476
        %478 = vmatmul.f32.gmra.mxu0 %v370
        %v479 = vpop.f32.mrf.mxu0
        %v480 = vadd.f32 0.0, %v479
        %481 = vmatmul.f32.gmra.mxu0 %v371
        %v482 = vpop.f32.mrf.mxu0
        %v483 = vadd.f32 0.0, %v482
        %484 = vmatmul.f32.gmra.mxu0 %v372
        %v485 = vpop.f32.mrf.mxu0
        %v486 = vadd.f32 0.0, %v485
        %487 = vmatmul.f32.gmra.mxu0 %v373
        %v488 = vpop.f32.mrf.mxu0
        %v489 = vadd.f32 0.0, %v488
        %490 = vmatmul.f32.gmra.mxu0 %v374
        %v491 = vpop.f32.mrf.mxu0
        %v492 = vadd.f32 0.0, %v491
        %493 = vmatmul.f32.gmra.mxu0 %v375
        %v494 = vpop.f32.mrf.mxu0
        %v495 = vadd.f32 0.0, %v494
        %496 = vmatmul.f32.gmra.mxu0 %v376
        %v497 = vpop.f32.mrf.mxu0
        %v498 = vadd.f32 0.0, %v497
        %499 = vmatmul.f32.gmra.mxu0 %v377
        %v500 = vpop.f32.mrf.mxu0
        %v501 = vadd.f32 0.0, %v500
        %502 = vmatmul.f32.gmra.mxu0 %v378
        %v503 = vpop.f32.mrf.mxu0
        %v504 = vadd.f32 0.0, %v503
        %505 = vmatmul.f32.gmra.mxu0 %v379
        %v506 = vpop.f32.mrf.mxu0
        %v507 = vadd.f32 0.0, %v506
        %508 = vdwg.mxu0
        %v509 = vadd.f32 %v316, %v414
        %v510 = vadd.f32 %v317, %v417
        %v511 = vadd.f32 %v318, %v420
        %v512 = vadd.f32 %v319, %v423
        %v513 = vadd.f32 %v320, %v426
        %v514 = vadd.f32 %v321, %v429
        %v515 = vadd.f32 %v322, %v432
        %v516 = vadd.f32 %v323, %v435
        %v517 = vadd.f32 %v324, %v438
        %v518 = vadd.f32 %v325, %v441
        %v519 = vadd.f32 %v326, %v444
        %v520 = vadd.f32 %v327, %v447
        %v521 = vadd.f32 %v328, %v450
        %v522 = vadd.f32 %v329, %v453
        %v523 = vadd.f32 %v330, %v456
        %v524 = vadd.f32 %v331, %v459
        %v525 = vadd.f32 %v332, %v462
        %v526 = vadd.f32 %v333, %v465
        %v527 = vadd.f32 %v334, %v468
        %v528 = vadd.f32 %v335, %v471
        %v529 = vadd.f32 %v336, %v474
        %v530 = vadd.f32 %v337, %v477
        %v531 = vadd.f32 %v338, %v480
        %v532 = vadd.f32 %v339, %v483
        %v533 = vadd.f32 %v340, %v486
        %v534 = vadd.f32 %v341, %v489
        %v535 = vadd.f32 %v342, %v492
        %v536 = vadd.f32 %v343, %v495
        %v537 = vadd.f32 %v344, %v498
        %v538 = vadd.f32 %v345, %v501
        %v539 = vadd.f32 %v346, %v504
        %v540 = vadd.f32 %v347, %v507
        %541 = vst [vmem:[#allocation2] sm:$0xff] %v509
        %542 = vst [vmem:[#allocation2 + $0x8] sm:$0xff] %v510
        %543 = vst [vmem:[#allocation2 + $0x10] sm:$0xff] %v511
        %544 = vst [vmem:[#allocation2 + $0x18] sm:$0xff] %v512
        %545 = vst [vmem:[#allocation2 + $0x20] sm:$0xff] %v513
        %546 = vst [vmem:[#allocation2 + $0x28] sm:$0xff] %v514
        %547 = vst [vmem:[#allocation2 + $0x30] sm:$0xff] %v515
        %548 = vst [vmem:[#allocation2 + $0x38] sm:$0xff] %v516
        %549 = vst [vmem:[#allocation2 + $0x40] sm:$0xff] %v517
        %550 = vst [vmem:[#allocation2 + $0x48] sm:$0xff] %v518
        %551 = vst [vmem:[#allocation2 + $0x50] sm:$0xff] %v519
        %552 = vst [vmem:[#allocation2 + $0x58] sm:$0xff] %v520
        %553 = vst [vmem:[#allocation2 + $0x60] sm:$0xff] %v521
        %554 = vst [vmem:[#allocation2 + $0x68] sm:$0xff] %v522
        %555 = vst [vmem:[#allocation2 + $0x70] sm:$0xff] %v523
        %556 = vst [vmem:[#allocation2 + $0x78] sm:$0xff] %v524
        %557 = vst [vmem:[#allocation2 + $0x80] sm:$0xff] %v525
        %558 = vst [vmem:[#allocation2 + $0x88] sm:$0xff] %v526
        %559 = vst [vmem:[#allocation2 + $0x90] sm:$0xff] %v527
        %560 = vst [vmem:[#allocation2 + $0x98] sm:$0xff] %v528
        %561 = vst [vmem:[#allocation2 + $0xa0] sm:$0xff] %v529
        %562 = vst [vmem:[#allocation2 + $0xa8] sm:$0xff] %v530
        %563 = vst [vmem:[#allocation2 + $0xb0] sm:$0xff] %v531
        %564 = vst [vmem:[#allocation2 + $0xb8] sm:$0xff] %v532
        %565 = vst [vmem:[#allocation2 + $0xc0] sm:$0xff] %v533
        %566 = vst [vmem:[#allocation2 + $0xc8] sm:$0xff] %v534
        %567 = vst [vmem:[#allocation2 + $0xd0] sm:$0xff] %v535
        %568 = vst [vmem:[#allocation2 + $0xd8] sm:$0xff] %v536
        %569 = vst [vmem:[#allocation2 + $0xe0] sm:$0xff] %v537
        %570 = vst [vmem:[#allocation2 + $0xe8] sm:$0xff] %v538
        %571 = vst [vmem:[#allocation2 + $0xf0] sm:$0xff] %v539
        %572 = vst [vmem:[#allocation2 + $0xf8] sm:$0xff] %v540
        // Predicated region
        $region49: #{tpu_custom_call.1} parent=31 // pred_check
          %p573 = pneg %p280
        $region50: #{tpu_custom_call.1} parent=31 // pred_check_branch
          %575 = sbr.rel (%p573) target = $region52
        $region51: #{tpu_custom_call.1} parent=31 // pred_region
          %v576 = vld [vmem:[#allocation2] sm:$0xff]
          %v577 = vld [vmem:[#allocation2 + $0x8] sm:$0xff]
          %v578 = vld [vmem:[#allocation2 + $0x10] sm:$0xff]
          %v579 = vld [vmem:[#allocation2 + $0x18] sm:$0xff]
          %v580 = vld [vmem:[#allocation2 + $0x20] sm:$0xff]
          %v581 = vld [vmem:[#allocation2 + $0x28] sm:$0xff]
          %v582 = vld [vmem:[#allocation2 + $0x30] sm:$0xff]
          %v583 = vld [vmem:[#allocation2 + $0x38] sm:$0xff]
          %v584 = vld [vmem:[#allocation2 + $0x40] sm:$0xff]
          %v585 = vld [vmem:[#allocation2 + $0x48] sm:$0xff]
          %v586 = vld [vmem:[#allocation2 + $0x50] sm:$0xff]
          %v587 = vld [vmem:[#allocation2 + $0x58] sm:$0xff]
          %v588 = vld [vmem:[#allocation2 + $0x60] sm:$0xff]
          %v589 = vld [vmem:[#allocation2 + $0x68] sm:$0xff]
          %v590 = vld [vmem:[#allocation2 + $0x70] sm:$0xff]
          %v591 = vld [vmem:[#allocation2 + $0x78] sm:$0xff]
          %v592 = vld [vmem:[#allocation2 + $0x80] sm:$0xff]
          %v593 = vld [vmem:[#allocation2 + $0x88] sm:$0xff]
          %v594 = vld [vmem:[#allocation2 + $0x90] sm:$0xff]
          %v595 = vld [vmem:[#allocation2 + $0x98] sm:$0xff]
          %v596 = vld [vmem:[#allocation2 + $0xa0] sm:$0xff]
          %v597 = vld [vmem:[#allocation2 + $0xa8] sm:$0xff]
          %v598 = vld [vmem:[#allocation2 + $0xb0] sm:$0xff]
          %v599 = vld [vmem:[#allocation2 + $0xb8] sm:$0xff]
          %v600 = vld [vmem:[#allocation2 + $0xc0] sm:$0xff]
          %v601 = vld [vmem:[#allocation2 + $0xc8] sm:$0xff]
          %v602 = vld [vmem:[#allocation2 + $0xd0] sm:$0xff]
          %v603 = vld [vmem:[#allocation2 + $0xd8] sm:$0xff]
          %v604 = vld [vmem:[#allocation2 + $0xe0] sm:$0xff]
          %v605 = vld [vmem:[#allocation2 + $0xe8] sm:$0xff]
          %v606 = vld [vmem:[#allocation2 + $0xf0] sm:$0xff]
          %v607 = vld [vmem:[#allocation2 + $0xf8] sm:$0xff]
          %v608 = vld [vmem:[#allocation8] sm:$0x1]
          %v609 = vperm.slane %v608, 0
          %v610 = vmul.f32 %v576, %v609
          %v611 = vmul.f32 %v577, %v609
          %v612 = vmul.f32 %v578, %v609
          %v613 = vmul.f32 %v579, %v609
          %v614 = vmul.f32 %v580, %v609
          %v615 = vmul.f32 %v581, %v609
          %v616 = vmul.f32 %v582, %v609
          %v617 = vmul.f32 %v583, %v609
          %v618 = vmul.f32 %v584, %v609
          %v619 = vmul.f32 %v585, %v609
          %v620 = vmul.f32 %v586, %v609
          %v621 = vmul.f32 %v587, %v609
          %v622 = vmul.f32 %v588, %v609
          %v623 = vmul.f32 %v589, %v609
          %v624 = vmul.f32 %v590, %v609
          %v625 = vmul.f32 %v591, %v609
          %v626 = vmul.f32 %v592, %v609
          %v627 = vmul.f32 %v593, %v609
          %v628 = vmul.f32 %v594, %v609
          %v629 = vmul.f32 %v595, %v609
          %v630 = vmul.f32 %v596, %v609
          %v631 = vmul.f32 %v597, %v609
          %v632 = vmul.f32 %v598, %v609
          %v633 = vmul.f32 %v599, %v609
          %v634 = vmul.f32 %v600, %v609
          %v635 = vmul.f32 %v601, %v609
          %v636 = vmul.f32 %v602, %v609
          %v637 = vmul.f32 %v603, %v609
          %v638 = vmul.f32 %v604, %v609
          %v639 = vmul.f32 %v605, %v609
          %v640 = vmul.f32 %v606, %v609
          %v641 = vmul.f32 %v607, %v609
          %v642 = vld [vmem:[#allocation8 + $0x1] sm:$0x1]
          %v643 = vperm.slane %v642, 0
          %v644 = vadd.f32 %v610, %v643
          %v645 = vadd.f32 %v611, %v643
          %v646 = vadd.f32 %v612, %v643
          %v647 = vadd.f32 %v613, %v643
          %v648 = vadd.f32 %v614, %v643
          %v649 = vadd.f32 %v615, %v643
          %v650 = vadd.f32 %v616, %v643
          %v651 = vadd.f32 %v617, %v643
          %v652 = vadd.f32 %v618, %v643
          %v653 = vadd.f32 %v619, %v643
          %v654 = vadd.f32 %v620, %v643
          %v655 = vadd.f32 %v621, %v643
          %v656 = vadd.f32 %v622, %v643
          %v657 = vadd.f32 %v623, %v643
          %v658 = vadd.f32 %v624, %v643
          %v659 = vadd.f32 %v625, %v643
          %v660 = vadd.f32 %v626, %v643
          %v661 = vadd.f32 %v627, %v643
          %v662 = vadd.f32 %v628, %v643
          %v663 = vadd.f32 %v629, %v643
          %v664 = vadd.f32 %v630, %v643
          %v665 = vadd.f32 %v631, %v643
          %v666 = vadd.f32 %v632, %v643
          %v667 = vadd.f32 %v633, %v643
          %v668 = vadd.f32 %v634, %v643
          %v669 = vadd.f32 %v635, %v643
          %v670 = vadd.f32 %v636, %v643
          %v671 = vadd.f32 %v637, %v643
          %v672 = vadd.f32 %v638, %v643
          %v673 = vadd.f32 %v639, %v643
          %v674 = vadd.f32 %v640, %v643
          %v675 = vadd.f32 %v641, %v643
          %v676 = vmax.f32 %v644, 0.0
          %v677 = vmax.f32 %v645, 0.0
          %v678 = vmax.f32 %v646, 0.0
          %v679 = vmax.f32 %v647, 0.0
          %v680 = vmax.f32 %v648, 0.0
          %v681 = vmax.f32 %v649, 0.0
          %v682 = vmax.f32 %v650, 0.0
          %v683 = vmax.f32 %v651, 0.0
          %v684 = vmax.f32 %v652, 0.0
          %v685 = vmax.f32 %v653, 0.0
          %v686 = vmax.f32 %v654, 0.0
          %v687 = vmax.f32 %v655, 0.0
          %v688 = vmax.f32 %v656, 0.0
          %v689 = vmax.f32 %v657, 0.0
          %v690 = vmax.f32 %v658, 0.0
          %v691 = vmax.f32 %v659, 0.0
          %v692 = vmax.f32 %v660, 0.0
          %v693 = vmax.f32 %v661, 0.0
          %v694 = vmax.f32 %v662, 0.0
          %v695 = vmax.f32 %v663, 0.0
          %v696 = vmax.f32 %v664, 0.0
          %v697 = vmax.f32 %v665, 0.0
          %v698 = vmax.f32 %v666, 0.0
          %v699 = vmax.f32 %v667, 0.0
          %v700 = vmax.f32 %v668, 0.0
          %v701 = vmax.f32 %v669, 0.0
          %v702 = vmax.f32 %v670, 0.0
          %v703 = vmax.f32 %v671, 0.0
          %v704 = vmax.f32 %v672, 0.0
          %v705 = vmax.f32 %v673, 0.0
          %v706 = vmax.f32 %v674, 0.0
          %v707 = vmax.f32 %v675, 0.0
          %708 = vst [vmem:[%s276] sm:$0xff] %v676
          %709 = vst [vmem:[%s276 + $0x8] sm:$0xff] %v677
          %710 = vst [vmem:[%s276 + $0x10] sm:$0xff] %v678
          %711 = vst [vmem:[%s276 + $0x18] sm:$0xff] %v679
          %712 = vst [vmem:[%s276 + $0x20] sm:$0xff] %v680
          %713 = vst [vmem:[%s276 + $0x28] sm:$0xff] %v681
          %714 = vst [vmem:[%s276 + $0x30] sm:$0xff] %v682
          %715 = vst [vmem:[%s276 + $0x38] sm:$0xff] %v683
          %716 = vst [vmem:[%s276 + $0x40] sm:$0xff] %v684
          %717 = vst [vmem:[%s276 + $0x48] sm:$0xff] %v685
          %718 = vst [vmem:[%s276 + $0x50] sm:$0xff] %v686
          %719 = vst [vmem:[%s276 + $0x58] sm:$0xff] %v687
          %720 = vst [vmem:[%s276 + $0x60] sm:$0xff] %v688
          %721 = vst [vmem:[%s276 + $0x68] sm:$0xff] %v689
          %722 = vst [vmem:[%s276 + $0x70] sm:$0xff] %v690
          %723 = vst [vmem:[%s276 + $0x78] sm:$0xff] %v691
          %724 = vst [vmem:[%s276 + $0x80] sm:$0xff] %v692
          %725 = vst [vmem:[%s276 + $0x88] sm:$0xff] %v693
          %726 = vst [vmem:[%s276 + $0x90] sm:$0xff] %v694
          %727 = vst [vmem:[%s276 + $0x98] sm:$0xff] %v695
          %728 = vst [vmem:[%s276 + $0xa0] sm:$0xff] %v696
          %729 = vst [vmem:[%s276 + $0xa8] sm:$0xff] %v697
          %730 = vst [vmem:[%s276 + $0xb0] sm:$0xff] %v698
          %731 = vst [vmem:[%s276 + $0xb8] sm:$0xff] %v699
          %732 = vst [vmem:[%s276 + $0xc0] sm:$0xff] %v700
          %733 = vst [vmem:[%s276 + $0xc8] sm:$0xff] %v701
          %734 = vst [vmem:[%s276 + $0xd0] sm:$0xff] %v702
          %735 = vst [vmem:[%s276 + $0xd8] sm:$0xff] %v703
          %736 = vst [vmem:[%s276 + $0xe0] sm:$0xff] %v704
          %737 = vst [vmem:[%s276 + $0xe8] sm:$0xff] %v705
          %738 = vst [vmem:[%s276 + $0xf0] sm:$0xff] %v706
          %739 = vst [vmem:[%s276 + $0xf8] sm:$0xff] %v707
        $region52: #{tpu_custom_call.1} parent=31 // pred_fallthru
          _
        %s740 = sand.u32 %s143, 1
        %s741 = scalar_lea.sflag [#allocation5], %s740
        %s742 = sand.u32 %s143, 1
        %s743 = smul.addr %s742, 256
        %s744 = scalar_lea.vmem [#allocation9], %s743
        // Predicated region
        $region53: #{tpu_custom_call.1} parent=31 // pred_check
          %p745 = pneg %p153
        $region54: #{tpu_custom_call.1} parent=31 // pred_check_branch
          %747 = sbr.rel (%p745) target = $region56
        $region55: #{tpu_custom_call.1} parent=31 // pred_region
          %s748 = smul.u32 32, %s28
          %750 = vsyncadd %s741, 0
          %s751 = sadd.s32 %s29, %s748
          %s752 = smul.addr %s27, 32
          %s753 = sadd.s32 %s751, %s752
          %s754 = smul.addr %s753, 8
          %s755 = scalar_lea.hbm %s3, %s754
          %s756 = sshll.u32 %s744, 4
          %s757 = int_to_ptr.vmem [resolvable:$true] %s756
          %s758 = sshll.u32 %s755, 4
          %s759 = int_to_ptr.hbm [resolvable:$true] %s758
          %764 = dma.vmem_to_hbm [thread:$0]  %s757, 4096, %s759, %s741, 128, 128, 8
        $region56: #{tpu_custom_call.1} parent=31 // pred_fallthru
          _
      $region32: #{tpu_custom_call.1} parent=5 // pred_fallthru
        _
      %p765 = scmp.le.s32.totalorder 2, %s16
      // Predicated region
      $region57: #{tpu_custom_call.1} parent=5 // pred_check
        %p766 = pneg %p765
      $region58: #{tpu_custom_call.1} parent=5 // pred_check_branch
        %768 = sbr.rel (%p766) target = $region60
      $region59: #{tpu_custom_call.1} parent=5 // pred_region
        %s769 = ssub.s32 %s16, 2
        // Predicated region
        $region61: #{tpu_custom_call.1} parent=59 // pred_check
          %p770 = pneg %p159
        $region62: #{tpu_custom_call.1} parent=59 // pred_check_branch
          %772 = sbr.rel (%p770) target = $region64
        $region63: #{tpu_custom_call.1} parent=59 // pred_region
          %s773 = sand.u32 %s144, 1
          %s774 = scalar_lea.sflag [#allocation5], %s773
          %s775 = sand.u32 %s144, 1
          %s776 = smul.addr %s775, 256
          %s777 = scalar_lea.vmem [#allocation9], %s776
          %779 = dma.done %s774, 4096
        $region64: #{tpu_custom_call.1} parent=59 // pred_fallthru
          _
      $region60: #{tpu_custom_call.1} parent=5 // pred_fallthru
        _
    $region6: #{tpu_custom_call.1} parent=1 // loop_footer
      %s20 = sadd.s32 1, %s16
    $region7: #{tpu_custom_call.1} parent=1 // loop_footer_branch
      %15 = sbr.rel target = $region3
    $region8: #{tpu_custom_call.1} parent=1 // loop_exit
      _
    %780 = vsyncpa [#allocation4], 1
    %s781 = scalar_lea.sflag [#allocation4], 1
    %782 = vsyncpa %s781, 1
    %783 = vsyncpa [#allocation7], 1
    %784 = vsyncpa [#allocation5], 1
    %s785 = scalar_lea.sflag [#allocation5], 1
    %786 = vsyncpa %s785, 1

</llo_original>
